<compile_context>
chip_gen: v7x
topology: tpu7x:2x2x1
jax: 0.10.0
libtpu: 0.0.40
codegen_flags: <defaults>
</compile_context>

<pallas_src>
from functools import partial

import jax
import jax.numpy as jnp
from jax.experimental import pallas as pl
from jax.experimental.pallas import tpu as pltpu

N_STATES = 2      # MountainCar-v0 observation dim
N_ACTIONS = 3     # MountainCar-v0 action count
HIDDEN = 50

LANE = 128
H_PAD = 128       # hidden padded to one lane-dense vreg width
OUT_PAD = 8       # output rows padded to one sublane group (3 -> 8)
TB_MAX = 2048     # max batch (lane) tile per grid step


def _bucket_batch(b):
    """Pad batch to a power of two >= 128 so each bucket compiles once."""
    return max(LANE, 1 << max(0, (b - 1).bit_length()))


def _choose_tile(b_pad):
    """Lane-dense batch tile; >=2 grid steps when possible (v7x megacore)."""
    if b_pad <= LANE:
        return b_pad
    return min(TB_MAX, b_pad // 2)


def _mlp_kernel(xt_ref, w1t_ref, w2t_ref, o_ref):
    # fc1 (batch on lanes): hT[j, b] = relu(sum_k w1[k, j] * x[b, k] + b1[j]).
    # K = N_STATES = 2 -> two VPU FMAs; the MXU would be >98% idle here.
    xt = xt_ref[...]                                    # [N_STATES, TB]
    ht = w1t_ref[:, N_STATES:N_STATES + 1]              # b1 column, [H_PAD, 1]
    for k in range(N_STATES):                           # unrolled at trace time
        ht = ht + w1t_ref[:, k:k + 1] * xt[k:k + 1, :]  # [H_PAD,1]*[1,TB]
    ht = jnp.maximum(ht, 0.0)                           # ReLU (row 127 stays 1.0)

    # fc2 (+ folded b2): [OUT_PAD, H_PAD] @ [H_PAD, TB] on the MXU, lane-dense
    # output store.  Note: default MXU precision rounds f32 operands through
    # bf16 passes; pass precision=jax.lax.Precision.HIGHEST here if bit-level
    # parity with the pure-f32 torch/XLA path is required.
    o_ref[...] = jnp.dot(w2t_ref[...], ht,
                         preferred_element_type=jnp.float32).astype(o_ref.dtype)


def prepare_params(w1, b1, w2, b2):
    """Pack / zero-pad parameters ONCE (outside the forward hot path).

      w1t: [H_PAD, N_STATES+1]  cols 0..N_STATES-1 = w1^T, last col = b1;
                                 row H_PAD-1 of the bias column is 1.0 so that
                                 hT[H_PAD-1, :] == 1 after ReLU (b2 carrier).
      w2t: [OUT_PAD, H_PAD]      rows = w2^T, column H_PAD-1 = b2 (folded bias).

    Zero padding leaves the math identical (padded lanes contribute 0)."""
    w1t = jnp.zeros((H_PAD, N_STATES + 1), jnp.float32)
    w1t = w1t.at[:HIDDEN, :N_STATES].set(w1.astype(jnp.float32).T)
    w1t = w1t.at[:HIDDEN, N_STATES].set(b1.reshape(-1).astype(jnp.float32))
    w1t = w1t.at[H_PAD - 1, N_STATES].set(1.0)   # constant-1 hidden unit

    w2t = jnp.zeros((OUT_PAD, H_PAD), jnp.float32)
    w2t = w2t.at[:N_ACTIONS, :HIDDEN].set(w2.astype(jnp.float32).T)
    w2t = w2t.at[:N_ACTIONS, H_PAD - 1].set(b2.reshape(-1).astype(jnp.float32))
    return w1t, w2t


@partial(jax.jit, static_argnames=("tb",))
def _forward_padded(xt, w1t, w2t, *, tb):
    """xt: [N_STATES, b_pad] -> outT: [OUT_PAD, b_pad] (compiled per bucket)."""
    b_pad = xt.shape[1]
    grid = (b_pad // tb,)
    return pl.pallas_call(
        _mlp_kernel,
        out_shape=jax.ShapeDtypeStruct((OUT_PAD, b_pad), jnp.float32),
        grid=grid,
        in_specs=[
            pl.BlockSpec((N_STATES, tb), lambda i: (0, i)),         # x batch tile
            pl.BlockSpec((H_PAD, N_STATES + 1), lambda i: (0, 0)),  # w1+b1 (resident)
            pl.BlockSpec((OUT_PAD, H_PAD), lambda i: (0, 0)),       # w2+b2 (resident)
        ],
        out_specs=pl.BlockSpec((OUT_PAD, tb), lambda i: (0, i)),
        compiler_params=pltpu.CompilerParams(
            dimension_semantics=("parallel",)),  # batch tiles across TCs on v7x
    )(xt, w1t, w2t)


def net_forward(x, w1t, w2t):
    """x: [B, N_STATES] f32, packed params -> [B, N_ACTIONS] f32."""
    B = x.shape[0]
    b_pad = _bucket_batch(B)
    tb = _choose_tile(b_pad)
    xt = jnp.pad(x.astype(jnp.float32).T, ((0, 0), (0, b_pad - B)))
    out_t = _forward_padded(xt, w1t, w2t, tb=tb)
    return out_t[:N_ACTIONS, :B].T


def init_params(key):
    """Parameter init mimicking the PyTorch module:
    weights ~ N(0, 0.1), biases ~ U(-1/sqrt(fan_in), 1/sqrt(fan_in))."""
    k1, k2, k3, k4 = jax.random.split(key, 4)
    # Stored as [in, out] (transposed relative to torch's [out, in]).
    w1 = 0.1 * jax.random.normal(k1, (N_STATES, HIDDEN), dtype=jnp.float32)
    w2 = 0.1 * jax.random.normal(k2, (HIDDEN, N_ACTIONS), dtype=jnp.float32)
    bound1 = 1.0 / jnp.sqrt(jnp.float32(N_STATES))
    bound2 = 1.0 / jnp.sqrt(jnp.float32(HIDDEN))
    b1 = jax.random.uniform(k3, (1, HIDDEN), jnp.float32, -bound1, bound1)
    b2 = jax.random.uniform(k4, (1, N_ACTIONS), jnp.float32, -bound2, bound2)
    return w1, b1, w2, b2


def net_reference(x, w1, b1, w2, b2):
    """Pure-JAX reference of the torch forward, in full f32 precision."""
    h = jnp.maximum(
        jnp.dot(x, w1, precision=jax.lax.Precision.HIGHEST) + b1, 0.0)
    return jnp.dot(h, w2, precision=jax.lax.Precision.HIGHEST) + b2


if __name__ == "__main__":
    key = jax.random.PRNGKey(0)
    kx, kp = jax.random.split(key)

    w1, b1, w2, b2 = init_params(kp)
    w1t, w2t = prepare_params(w1, b1, w2, b2)   # packed once, outside hot path

    # Small batch (DQN "act" path): B=2 -> bucketed to 128, grid=(1,).
    B = 2
    x = jax.random.normal(kx, (B, N_STATES), dtype=jnp.float32)
    out = jax.block_until_ready(net_forward(x, w1t, w2t))
    ref = net_reference(x, w1, b1, w2, b2)
    assert out.shape == (B, N_ACTIONS)
    # Tolerance accounts for default MXU matmul precision (bf16 passes).
    assert jnp.allclose(out, ref, atol=5e-3, rtol=1e-2), \
        f"max abs err {jnp.max(jnp.abs(out - ref))}"

    # Larger replay-buffer batch: B=1000 -> bucketed to 1024, tb=512, grid=(2,)
    # (exercises the multi-tile / megacore path).
    B2 = 1000
    x2 = jax.random.normal(jax.random.PRNGKey(1), (B2, N_STATES), jnp.float32)
    out2 = jax.block_until_ready(net_forward(x2, w1t, w2t))
    ref2 = net_reference(x2, w1, b1, w2, b2)
    assert out2.shape == (B2, N_ACTIONS)
    assert jnp.allclose(out2, ref2, atol=5e-3, rtol=1e-2), \
        f"max abs err {jnp.max(jnp.abs(out2 - ref2))}"

    print("KERNEL_OK")
</pallas_src>

<mosaic_0001>
module attributes {stable_mosaic.version = 11 : i64} {
  func.func @_mlp_kernel(%arg0: i32, %arg1: memref<2x128xf32, #tpu.memory_space<vmem>>, %arg2: memref<128x3xf32, #tpu.memory_space<vmem>>, %arg3: memref<8x128xf32, #tpu.memory_space<vmem>>, %arg4: memref<8x128xf32, #tpu.memory_space<vmem>>) attributes {dimension_semantics = [#tpu.dimension_semantics<parallel>], iteration_bounds = array<i64: 1>, scalar_prefetch = 0 : i64, scratch_operands = 0 : i64, tpu.core_type = #tpu.core_type<tc>, window_params = [{transform_indices = @transform_0, window_bounds = array<i64: 2, 128>}, {pipeline_mode = #tpu.pipeline_mode<synchronous>, transform_indices = @transform_1, window_bounds = array<i64: 128, 3>}, {pipeline_mode = #tpu.pipeline_mode<synchronous>, transform_indices = @transform_2, window_bounds = array<i64: 8, 128>}, {transform_indices = @transform_3, window_bounds = array<i64: 8, 128>}]} {
    %c0 = arith.constant 0 : index
    %c0_0 = arith.constant 0 : index
    %0 = vector.load %arg1[%c0, %c0_0] : memref<2x128xf32, #tpu.memory_space<vmem>>, vector<2x128xf32>
    %c0_1 = arith.constant 0 : index
    %c2 = arith.constant 2 : index
    %1 = vector.load %arg2[%c0_1, %c2] : memref<128x3xf32, #tpu.memory_space<vmem>>, vector<128x1xf32>
    %c0_2 = arith.constant 0 : index
    %c0_3 = arith.constant 0 : index
    %2 = vector.load %arg2[%c0_2, %c0_3] : memref<128x3xf32, #tpu.memory_space<vmem>>, vector<128x1xf32>
    %3 = vector.extract_strided_slice %0 {offsets = [0, 0], sizes = [1, 128], strides = [1, 1]} : vector<2x128xf32> to vector<1x128xf32>
    %4 = vector.broadcast %2 : vector<128x1xf32> to vector<128x128xf32>
    %5 = vector.broadcast %3 : vector<1x128xf32> to vector<128x128xf32>
    %6 = arith.mulf %4, %5 : vector<128x128xf32>
    %7 = vector.broadcast %1 : vector<128x1xf32> to vector<128x128xf32>
    %8 = arith.addf %7, %6 : vector<128x128xf32>
    %c0_4 = arith.constant 0 : index
    %c1 = arith.constant 1 : index
    %9 = vector.load %arg2[%c0_4, %c1] : memref<128x3xf32, #tpu.memory_space<vmem>>, vector<128x1xf32>
    %10 = vector.extract_strided_slice %0 {offsets = [1, 0], sizes = [1, 128], strides = [1, 1]} : vector<2x128xf32> to vector<1x128xf32>
    %11 = vector.broadcast %9 : vector<128x1xf32> to vector<128x128xf32>
    %12 = vector.broadcast %10 : vector<1x128xf32> to vector<128x128xf32>
    %13 = arith.mulf %11, %12 : vector<128x128xf32>
    %14 = arith.addf %8, %13 : vector<128x128xf32>
    %cst = arith.constant 0.000000e+00 : f32
    %15 = vector.broadcast %cst : f32 to vector<128x128xf32>
    %16 = arith.maximumf %14, %15 : vector<128x128xf32>
    %c0_5 = arith.constant 0 : index
    %c0_6 = arith.constant 0 : index
    %17 = vector.load %arg3[%c0_5, %c0_6] : memref<8x128xf32, #tpu.memory_space<vmem>>, vector<8x128xf32>
    %cst_7 = arith.constant dense<0.000000e+00> : vector<8x128xf32>
    %18 = tpu.matmul %17, %16, %cst_7 {dimension_numbers = #tpu.dot_dimension_numbers<[1], [0], [0], [1], [0, 0, 1, 1], [], []>} : vector<8x128xf32>, vector<128x128xf32>, vector<8x128xf32> -> vector<8x128xf32>
    %c0_8 = arith.constant 0 : index
    %c0_9 = arith.constant 0 : index
    %19 = vector.load %arg4[%c0_8, %c0_9] : memref<8x128xf32, #tpu.memory_space<vmem>>, vector<8x128xf32>
    tpu.vector_store %arg4[%c0_8, %c0_9], %18 {strides = array<i32>} : memref<8x128xf32, #tpu.memory_space<vmem>>, vector<8x128xf32>,
    return
  }
  func.func @transform_0(%arg0: i32) -> (i32, i32) {
    %c0_i32 = arith.constant 0 : i32
    %c0_i32_0 = arith.constant 0 : i32
    return %c0_i32, %arg0 : i32, i32
  }
  func.func @transform_1(%arg0: i32) -> (i32, i32) {
    %c0_i32 = arith.constant 0 : i32
    %c0_i32_0 = arith.constant 0 : i32
    %c0_i32_1 = arith.constant 0 : i32
    return %c0_i32, %c0_i32_0 : i32, i32
  }
  func.func @transform_2(%arg0: i32) -> (i32, i32) {
    %c0_i32 = arith.constant 0 : i32
    %c0_i32_0 = arith.constant 0 : i32
    %c0_i32_1 = arith.constant 0 : i32
    return %c0_i32, %c0_i32_0 : i32, i32
  }
  func.func @transform_3(%arg0: i32) -> (i32, i32) {
    %c0_i32 = arith.constant 0 : i32
    %c0_i32_0 = arith.constant 0 : i32
    return %c0_i32, %arg0 : i32, i32
  }
}

</mosaic_0001>

<llo_original>
// kernel: _forward_padded.1
$region0: #{_forward_padded.1}
  #allocation0 [shape = 'u32[]', space=smem, size = 0x4, offset = 0x4, fixed_abs, tag = 'smem constant byte address 0x4 - core index']
  #allocation1 [shape = 'u32[144,128]{1,0:T(1,128)}', space=vmem, size = 0x12000, scoped, tag = 'internal scratch']
  %s0 = inlined_call_operand.vmem [shape: f32[2,128], index: 0, kind: input, shape index: {}]
  %s1 = inlined_call_operand.vmem [shape: f32[128,3], index: 1, kind: input, shape index: {}]
  %s2 = inlined_call_operand.vmem [shape: f32[8,128], index: 2, kind: input, shape index: {}]
  %s3 = inlined_call_operand.hbm [shape: f32[8,128], index: 3, kind: output, shape index: {}]
  %s4 = sld [smem:[#allocation0]]
  $region22: #{_forward_padded.1} parent=0
    _
  %s6 = ssub.s32 1, %s4
  %s7 = scalar_select 0, %s6, %s4
  $region1: #{_forward_padded.1} parent=0
    #allocation2 [shape = 'u8[4096]{0}', space=vmem, size = 0x1000, scoped, tag = 'output window, operand 0, single buffered']
    #allocation3 [shape = 's32[1]{0}', space=sflag, size = 0x4, scoped, tag = 'scoped memory for _forward_padded.1']
    %8 = vsyncpa [#allocation3], 0
    // Predicated region
    $region2: #{_forward_padded.1} parent=1 // pred_check
      _
    $region3: #{_forward_padded.1} parent=1 // pred_check_branch
      %10 = sbr.rel (0) target = $region5
    $region4: #{_forward_padded.1} parent=1 // pred_region
      _
    $region5: #{_forward_padded.1} parent=1 // pred_fallthru
      _
    // Predicated region
    $region6: #{_forward_padded.1} parent=1 // pred_check
      _
    $region7: #{_forward_padded.1} parent=1 // pred_check_branch
      %12 = sbr.rel (0) target = $region9
    $region8: #{_forward_padded.1} parent=1 // pred_region
      _
    $region9: #{_forward_padded.1} parent=1 // pred_fallthru
      _
    // Predicated region
    $region10: #{_forward_padded.1} parent=1 // pred_check
      _
    $region11: #{_forward_padded.1} parent=1 // pred_check_branch
      %14 = sbr.rel (0) target = $region13
    $region12: #{_forward_padded.1} parent=1 // pred_region
      _
    $region13: #{_forward_padded.1} parent=1 // pred_fallthru
      _
    %v15 = vld [vmem:[%s0] sm:$0x3]
    %v16 = vld [vmem:[%s1] sm:$0xff]
    %v17 = vld [vmem:[%s1 + $0x8] sm:$0xff]
    %v18 = vld [vmem:[%s1 + $0x10] sm:$0xff]
    %v19 = vld [vmem:[%s1 + $0x18] sm:$0xff]
    %v20 = vld [vmem:[%s1 + $0x20] sm:$0xff]
    %v21 = vld [vmem:[%s1 + $0x28] sm:$0xff]
    %v22 = vld [vmem:[%s1 + $0x30] sm:$0xff]
    %v23 = vld [vmem:[%s1 + $0x38] sm:$0xff]
    %v24 = vld [vmem:[%s1 + $0x40] sm:$0xff]
    %v25 = vld [vmem:[%s1 + $0x48] sm:$0xff]
    %v26 = vld [vmem:[%s1 + $0x50] sm:$0xff]
    %v27 = vld [vmem:[%s1 + $0x58] sm:$0xff]
    %v28 = vld [vmem:[%s1 + $0x60] sm:$0xff]
    %v29 = vld [vmem:[%s1 + $0x68] sm:$0xff]
    %v30 = vld [vmem:[%s1 + $0x70] sm:$0xff]
    %v31 = vld [vmem:[%s1 + $0x78] sm:$0xff]
    %33 = vset.pattern.permute.xlu0 0
    %34 = vperm.xlu0 %33, %v16
    %v35 = vpop.permute.xlu0 %34
    %38 = vset.pattern.permute.xlu0 0
    %39 = vperm.xlu0 %38, %v17
    %v40 = vpop.permute.xlu0 %39
    %43 = vset.pattern.permute.xlu0 0
    %44 = vperm.xlu0 %43, %v18
    %v45 = vpop.permute.xlu0 %44
    %48 = vset.pattern.permute.xlu0 0
    %49 = vperm.xlu0 %48, %v19
    %v50 = vpop.permute.xlu0 %49
    %53 = vset.pattern.permute.xlu0 0
    %54 = vperm.xlu0 %53, %v20
    %v55 = vpop.permute.xlu0 %54
    %58 = vset.pattern.permute.xlu0 0
    %59 = vperm.xlu0 %58, %v21
    %v60 = vpop.permute.xlu0 %59
    %63 = vset.pattern.permute.xlu0 0
    %64 = vperm.xlu0 %63, %v22
    %v65 = vpop.permute.xlu0 %64
    %68 = vset.pattern.permute.xlu0 0
    %69 = vperm.xlu0 %68, %v23
    %v70 = vpop.permute.xlu0 %69
    %73 = vset.pattern.permute.xlu0 0
    %74 = vperm.xlu0 %73, %v24
    %v75 = vpop.permute.xlu0 %74
    %78 = vset.pattern.permute.xlu0 0
    %79 = vperm.xlu0 %78, %v25
    %v80 = vpop.permute.xlu0 %79
    %83 = vset.pattern.permute.xlu0 0
    %84 = vperm.xlu0 %83, %v26
    %v85 = vpop.permute.xlu0 %84
    %88 = vset.pattern.permute.xlu0 0
    %89 = vperm.xlu0 %88, %v27
    %v90 = vpop.permute.xlu0 %89
    %93 = vset.pattern.permute.xlu0 0
    %94 = vperm.xlu0 %93, %v28
    %v95 = vpop.permute.xlu0 %94
    %98 = vset.pattern.permute.xlu0 0
    %99 = vperm.xlu0 %98, %v29
    %v100 = vpop.permute.xlu0 %99
    %103 = vset.pattern.permute.xlu0 0
    %104 = vperm.xlu0 %103, %v30
    %v105 = vpop.permute.xlu0 %104
    %108 = vset.pattern.permute.xlu0 0
    %109 = vperm.xlu0 %108, %v31
    %v110 = vpop.permute.xlu0 %109
    %v112 = vlaneseq
    %v113 = vshrl.u32 %v112, 7
    %v114 = vsub.s32 0, %v113
    %v115 = vrot.slane %v15, %v114
    %v116 = vmul.f32 %v35, %v115
    %v117 = vmul.f32 %v40, %v115
    %v118 = vmul.f32 %v45, %v115
    %v119 = vmul.f32 %v50, %v115
    %v120 = vmul.f32 %v55, %v115
    %v121 = vmul.f32 %v60, %v115
    %v122 = vmul.f32 %v65, %v115
    %v123 = vmul.f32 %v70, %v115
    %v124 = vmul.f32 %v75, %v115
    %v125 = vmul.f32 %v80, %v115
    %v126 = vmul.f32 %v85, %v115
    %v127 = vmul.f32 %v90, %v115
    %v128 = vmul.f32 %v95, %v115
    %v129 = vmul.f32 %v100, %v115
    %v130 = vmul.f32 %v105, %v115
    %v131 = vmul.f32 %v110, %v115
    %132 = vset.pattern.permute.xlu0 2
    %133 = vperm.xlu0 %132, %v16
    %v134 = vpop.permute.xlu0 %133
    %136 = vset.pattern.permute.xlu0 2
    %137 = vperm.xlu0 %136, %v17
    %v138 = vpop.permute.xlu0 %137
    %140 = vset.pattern.permute.xlu0 2
    %141 = vperm.xlu0 %140, %v18
    %v142 = vpop.permute.xlu0 %141
    %144 = vset.pattern.permute.xlu0 2
    %145 = vperm.xlu0 %144, %v19
    %v146 = vpop.permute.xlu0 %145
    %148 = vset.pattern.permute.xlu0 2
    %149 = vperm.xlu0 %148, %v20
    %v150 = vpop.permute.xlu0 %149
    %152 = vset.pattern.permute.xlu0 2
    %153 = vperm.xlu0 %152, %v21
    %v154 = vpop.permute.xlu0 %153
    %156 = vset.pattern.permute.xlu0 2
    %157 = vperm.xlu0 %156, %v22
    %v158 = vpop.permute.xlu0 %157
    %160 = vset.pattern.permute.xlu0 2
    %161 = vperm.xlu0 %160, %v23
    %v162 = vpop.permute.xlu0 %161
    %164 = vset.pattern.permute.xlu0 2
    %165 = vperm.xlu0 %164, %v24
    %v166 = vpop.permute.xlu0 %165
    %168 = vset.pattern.permute.xlu0 2
    %169 = vperm.xlu0 %168, %v25
    %v170 = vpop.permute.xlu0 %169
    %172 = vset.pattern.permute.xlu0 2
    %173 = vperm.xlu0 %172, %v26
    %v174 = vpop.permute.xlu0 %173
    %176 = vset.pattern.permute.xlu0 2
    %177 = vperm.xlu0 %176, %v27
    %v178 = vpop.permute.xlu0 %177
    %180 = vset.pattern.permute.xlu0 2
    %181 = vperm.xlu0 %180, %v28
    %v182 = vpop.permute.xlu0 %181
    %184 = vset.pattern.permute.xlu0 2
    %185 = vperm.xlu0 %184, %v29
    %v186 = vpop.permute.xlu0 %185
    %188 = vset.pattern.permute.xlu0 2
    %189 = vperm.xlu0 %188, %v30
    %v190 = vpop.permute.xlu0 %189
    %192 = vset.pattern.permute.xlu0 2
    %193 = vperm.xlu0 %192, %v31
    %v194 = vpop.permute.xlu0 %193
    %v196 = vadd.f32 %v134, %v116
    %v197 = vadd.f32 %v138, %v117
    %v198 = vadd.f32 %v142, %v118
    %v199 = vadd.f32 %v146, %v119
    %v200 = vadd.f32 %v150, %v120
    %v201 = vadd.f32 %v154, %v121
    %v202 = vadd.f32 %v158, %v122
    %v203 = vadd.f32 %v162, %v123
    %v204 = vadd.f32 %v166, %v124
    %v205 = vadd.f32 %v170, %v125
    %v206 = vadd.f32 %v174, %v126
    %v207 = vadd.f32 %v178, %v127
    %v208 = vadd.f32 %v182, %v128
    %v209 = vadd.f32 %v186, %v129
    %v210 = vadd.f32 %v190, %v130
    %v211 = vadd.f32 %v194, %v131
    %212 = vset.pattern.permute.xlu0 1
    %213 = vperm.xlu0 %212, %v16
    %v214 = vpop.permute.xlu0 %213
    %216 = vset.pattern.permute.xlu0 1
    %217 = vperm.xlu0 %216, %v17
    %v218 = vpop.permute.xlu0 %217
    %220 = vset.pattern.permute.xlu0 1
    %221 = vperm.xlu0 %220, %v18
    %v222 = vpop.permute.xlu0 %221
    %224 = vset.pattern.permute.xlu0 1
    %225 = vperm.xlu0 %224, %v19
    %v226 = vpop.permute.xlu0 %225
    %228 = vset.pattern.permute.xlu0 1
    %229 = vperm.xlu0 %228, %v20
    %v230 = vpop.permute.xlu0 %229
    %232 = vset.pattern.permute.xlu0 1
    %233 = vperm.xlu0 %232, %v21
    %v234 = vpop.permute.xlu0 %233
    %236 = vset.pattern.permute.xlu0 1
    %237 = vperm.xlu0 %236, %v22
    %v238 = vpop.permute.xlu0 %237
    %240 = vset.pattern.permute.xlu0 1
    %241 = vperm.xlu0 %240, %v23
    %v242 = vpop.permute.xlu0 %241
    %244 = vset.pattern.permute.xlu0 1
    %245 = vperm.xlu0 %244, %v24
    %v246 = vpop.permute.xlu0 %245
    %248 = vset.pattern.permute.xlu0 1
    %249 = vperm.xlu0 %248, %v25
    %v250 = vpop.permute.xlu0 %249
    %252 = vset.pattern.permute.xlu0 1
    %253 = vperm.xlu0 %252, %v26
    %v254 = vpop.permute.xlu0 %253
    %256 = vset.pattern.permute.xlu0 1
    %257 = vperm.xlu0 %256, %v27
    %v258 = vpop.permute.xlu0 %257
    %260 = vset.pattern.permute.xlu0 1
    %261 = vperm.xlu0 %260, %v28
    %v262 = vpop.permute.xlu0 %261
    %264 = vset.pattern.permute.xlu0 1
    %265 = vperm.xlu0 %264, %v29
    %v266 = vpop.permute.xlu0 %265
    %268 = vset.pattern.permute.xlu0 1
    %269 = vperm.xlu0 %268, %v30
    %v270 = vpop.permute.xlu0 %269
    %272 = vset.pattern.permute.xlu0 1
    %273 = vperm.xlu0 %272, %v31
    %v274 = vpop.permute.xlu0 %273
    %v276 = vlaneseq
    %v277 = vshrl.u32 %v276, 7
    %v278 = vsub.s32 1, %v277
    %v279 = vrot.slane %v15, %v278
    %v280 = vmul.f32 %v214, %v279
    %v281 = vmul.f32 %v218, %v279
    %v282 = vmul.f32 %v222, %v279
    %v283 = vmul.f32 %v226, %v279
    %v284 = vmul.f32 %v230, %v279
    %v285 = vmul.f32 %v234, %v279
    %v286 = vmul.f32 %v238, %v279
    %v287 = vmul.f32 %v242, %v279
    %v288 = vmul.f32 %v246, %v279
    %v289 = vmul.f32 %v250, %v279
    %v290 = vmul.f32 %v254, %v279
    %v291 = vmul.f32 %v258, %v279
    %v292 = vmul.f32 %v262, %v279
    %v293 = vmul.f32 %v266, %v279
    %v294 = vmul.f32 %v270, %v279
    %v295 = vmul.f32 %v274, %v279
    %v296 = vadd.f32 %v196, %v280
    %v297 = vadd.f32 %v197, %v281
    %v298 = vadd.f32 %v198, %v282
    %v299 = vadd.f32 %v199, %v283
    %v300 = vadd.f32 %v200, %v284
    %v301 = vadd.f32 %v201, %v285
    %v302 = vadd.f32 %v202, %v286
    %v303 = vadd.f32 %v203, %v287
    %v304 = vadd.f32 %v204, %v288
    %v305 = vadd.f32 %v205, %v289
    %v306 = vadd.f32 %v206, %v290
    %v307 = vadd.f32 %v207, %v291
    %v308 = vadd.f32 %v208, %v292
    %v309 = vadd.f32 %v209, %v293
    %v310 = vadd.f32 %v210, %v294
    %v311 = vadd.f32 %v211, %v295
    %v312 = vmax.f32 %v296, 0.0
    %v313 = vmax.f32 %v297, 0.0
    %v314 = vmax.f32 %v298, 0.0
    %v315 = vmax.f32 %v299, 0.0
    %v316 = vmax.f32 %v300, 0.0
    %v317 = vmax.f32 %v301, 0.0
    %v318 = vmax.f32 %v302, 0.0
    %v319 = vmax.f32 %v303, 0.0
    %v320 = vmax.f32 %v304, 0.0
    %v321 = vmax.f32 %v305, 0.0
    %v322 = vmax.f32 %v306, 0.0
    %v323 = vmax.f32 %v307, 0.0
    %v324 = vmax.f32 %v308, 0.0
    %v325 = vmax.f32 %v309, 0.0
    %v326 = vmax.f32 %v310, 0.0
    %v327 = vmax.f32 %v311, 0.0
    %v328 = vld [vmem:[%s2] sm:$0xff]
    %329 = vmatprep.subr.mxu0 0.0
    %330 = vmatpush1.msra.mxu0 %v312
    %331 = vmatprep.subr.mxu0 0.0
    %332 = vmatpush1.msra.mxu0 %v313
    %333 = vmatprep.subr.mxu0 0.0
    %334 = vmatpush1.msra.mxu0 %v314
    %335 = vmatprep.subr.mxu0 0.0
    %336 = vmatpush1.msra.mxu0 %v315
    %337 = vmatprep.subr.mxu0 0.0
    %338 = vmatpush1.msra.mxu0 %v316
    %339 = vmatprep.subr.mxu0 0.0
    %340 = vmatpush1.msra.mxu0 %v317
    %341 = vmatprep.subr.mxu0 0.0
    %342 = vmatpush1.msra.mxu0 %v318
    %343 = vmatprep.subr.mxu0 0.0
    %344 = vmatpush1.msra.mxu0 %v319
    %345 = vmatprep.subr.mxu0 0.0
    %346 = vmatpush1.msra.mxu0 %v320
    %347 = vmatprep.subr.mxu0 0.0
    %348 = vmatpush1.msra.mxu0 %v321
    %349 = vmatprep.subr.mxu0 0.0
    %350 = vmatpush1.msra.mxu0 %v322
    %351 = vmatprep.subr.mxu0 0.0
    %352 = vmatpush1.msra.mxu0 %v323
    %353 = vmatprep.subr.mxu0 0.0
    %354 = vmatpush1.msra.mxu0 %v324
    %355 = vmatprep.subr.mxu0 0.0
    %356 = vmatpush1.msra.mxu0 %v325
    %357 = vmatprep.subr.mxu0 0.0
    %358 = vmatpush1.msra.mxu0 %v326
    %359 = vmatprep.subr.mxu0 0.0
    %360 = vmatpush1.msra.mxu0 %v327
    %361 = vmatprep.subr.mxu0 0.0
    %362 = vmatpush1.msra.mxu0 0.0
    %363 = vmatprep.subr.mxu0 0.0
    %364 = vmatpush1.msra.mxu0 0.0
    %365 = vmatprep.subr.mxu0 0.0
    %366 = vmatpush1.msra.mxu0 0.0
    %367 = vmatprep.subr.mxu0 0.0
    %368 = vmatpush1.msra.mxu0 0.0
    %369 = vmatprep.subr.mxu0 0.0
    %370 = vmatpush1.msra.mxu0 0.0
    %371 = vmatprep.subr.mxu0 0.0
    %372 = vmatpush1.msra.mxu0 0.0
    %373 = vmatprep.subr.mxu0 0.0
    %374 = vmatpush1.msra.mxu0 0.0
    %375 = vmatprep.subr.mxu0 0.0
    %376 = vmatpush1.msra.mxu0 0.0
    %377 = vmatprep.subr.mxu0 0.0
    %378 = vmatpush1.msra.mxu0 0.0
    %379 = vmatprep.subr.mxu0 0.0
    %380 = vmatpush1.msra.mxu0 0.0
    %381 = vmatprep.subr.mxu0 0.0
    %382 = vmatpush1.msra.mxu0 0.0
    %383 = vmatprep.subr.mxu0 0.0
    %384 = vmatpush1.msra.mxu0 0.0
    %385 = vmatprep.subr.mxu0 0.0
    %386 = vmatpush1.msra.mxu0 0.0
    %387 = vmatprep.subr.mxu0 0.0
    %388 = vmatpush1.msra.mxu0 0.0
    %389 = vmatprep.subr.mxu0 0.0
    %390 = vmatpush1.msra.mxu0 0.0
    %391 = vmatprep.subr.mxu0 0.0
    %392 = vmatpush1.msra.mxu0 0.0
    %393 = vmatprep.mubr.f32.mxu0 0.0
    %394 = vmatmul.mubr.f32.gmra.mrb[0].mxu0 %v328
    %v395 = vpop.f32.mrb[0].mxu0
    %v396 = vadd.f32 0.0, %v395
    %v397 = vpop.f32.mrb[0].mxu0
    %398 = vdwg.mxu0
    %399 = vst [vmem:[#allocation2] sm:$0xff] %v396
    // Predicated region
    $region14: #{_forward_padded.1} parent=1 // pred_check
      _
    $region15: #{_forward_padded.1} parent=1 // pred_check_branch
      %401 = sbr.rel (0) target = $region17
    $region16: #{_forward_padded.1} parent=1 // pred_region
      %s403 = ssub.s32 128, 128
      %404 = vsyncadd [#allocation3], %s403
      %s406 = sshll.u32 [#allocation2], 4
      %s407 = int_to_ptr.vmem [resolvable:$true] %s406
      %409 = dma.vmem_to_hbm [thread:$0]  %s407, 128, %s3, [#allocation3]
    $region17: #{_forward_padded.1} parent=1 // pred_fallthru
      _
    // Predicated region
    $region18: #{_forward_padded.1} parent=1 // pred_check
      _
    $region19: #{_forward_padded.1} parent=1 // pred_check_branch
      %411 = sbr.rel (0) target = $region21
    $region20: #{_forward_padded.1} parent=1 // pred_region
      %412 = dma.done [#allocation3], 128
    $region21: #{_forward_padded.1} parent=1 // pred_fallthru
      _
    %413 = vsyncpa [#allocation3], 1

</llo_original>
